<compile_context>
chip_gen: v5e
topology: v5e:2x2
jax: 0.10.0
libtpu: 0.0.40
codegen_flags: <defaults>
</compile_context>

<pallas_src>
import functools

import jax
import jax.numpy as jnp
from jax.experimental import pallas as pl
from jax.experimental.pallas import tpu as pltpu


# ----------------------------------------------------------------------------
# Small helpers
# ----------------------------------------------------------------------------
def _round_up(x, m):
    return ((x + m - 1) // m) * m


def _pick_bm(batch):
    """Batch tile: single block for small B, 256/512-row tiles for large B."""
    if batch <= 256:
        return batch
    return 512 if batch >= 1024 else 256


def _pad_to(x, target_shape):
    pads = [(0, t - s) for s, t in zip(x.shape, target_shape)]
    if all(p == (0, 0) for p in pads):
        return x
    return jnp.pad(x, pads)


def _vmem_limit_bytes(raw_bytes):
    # 2x headroom, floored at 8 MiB, capped at v7x physical (64 MiB).
    return int(min(max(raw_bytes * 2, 8 * 2**20), 64 * 2**20))


def _gate_dtype_for_device(compute_dtype):
    """bf16 transcendentals only where the EUP/VPU supports them (v6e/v7x)."""
    if jnp.dtype(compute_dtype) == jnp.dtype(jnp.float32):
        return jnp.float32
    kind = jax.devices()[0].device_kind.lower()
    if "v6" in kind or "v7" in kind:
        return jnp.bfloat16
    return jnp.float32


# ----------------------------------------------------------------------------
# Kernels
# ----------------------------------------------------------------------------
def _lstm_cell_kernel(x_ref, h_ref, c_ref, wx_ref, wh_ref, b_ref,
                      h_out_ref, c_out_ref, *, matmul_dtype, gate_dtype):
    """One LSTMCell step.  Weight columns are pre-ordered [i | f | o | g],
    each gate block padded to a 128-lane multiple."""
    Hp = h_ref.shape[1]

    x = x_ref[...].astype(matmul_dtype)
    h = h_ref[...].astype(matmul_dtype)
    # Two accumulating MXU dots (no lane-axis concat copy).
    gates = (jnp.dot(x, wx_ref[...], preferred_element_type=jnp.float32)
             + jnp.dot(h, wh_ref[...], preferred_element_type=jnp.float32)
             + b_ref[...])
    gates = gates.astype(gate_dtype)

    # [i|f|o] share one contiguous sigmoid span; g gets the tanh.
    sig = jax.nn.sigmoid(gates[:, : 3 * Hp])
    g = jnp.tanh(gates[:, 3 * Hp:]).astype(jnp.float32)
    i = sig[:, 0 * Hp:1 * Hp].astype(jnp.float32)
    f = sig[:, 1 * Hp:2 * Hp].astype(jnp.float32)
    o = sig[:, 2 * Hp:3 * Hp].astype(jnp.float32)

    c_new = f * c_ref[...].astype(jnp.float32) + i * g
    h_new = o * jnp.tanh(c_new.astype(gate_dtype)).astype(jnp.float32)

    h_out_ref[...] = h_new.astype(h_out_ref.dtype)
    c_out_ref[...] = c_new.astype(c_out_ref.dtype)


def _lstm_rollout_kernel(x_ref, h0_ref, c0_ref, wx_ref, wh_ref, b_ref,
                         hseq_ref, hfin_ref, cfin_ref,
                         h_scr, c_scr, *, matmul_dtype, gate_dtype):
    """T fused LSTMCell steps: weights stay resident in VMEM across the whole
    time axis; h/c are carried in f32 VMEM scratch (P3 init/finalize)."""
    t = pl.program_id(1)

    @pl.when(t == 0)
    def _():
        h_scr[...] = h0_ref[...].astype(jnp.float32)
        c_scr[...] = c0_ref[...].astype(jnp.float32)

    Hp = h_scr.shape[1]
    x = x_ref[0].astype(matmul_dtype)            # (bm, A_pad)
    h = h_scr[...].astype(matmul_dtype)
    gates = (jnp.dot(x, wx_ref[...], preferred_element_type=jnp.float32)
             + jnp.dot(h, wh_ref[...], preferred_element_type=jnp.float32)
             + b_ref[...]).astype(gate_dtype)

    sig = jax.nn.sigmoid(gates[:, : 3 * Hp])
    g = jnp.tanh(gates[:, 3 * Hp:]).astype(jnp.float32)
    i = sig[:, 0 * Hp:1 * Hp].astype(jnp.float32)
    f = sig[:, 1 * Hp:2 * Hp].astype(jnp.float32)
    o = sig[:, 2 * Hp:3 * Hp].astype(jnp.float32)

    c_new = f * c_scr[...] + i * g
    h_new = o * jnp.tanh(c_new.astype(gate_dtype)).astype(jnp.float32)

    h_scr[...] = h_new
    c_scr[...] = c_new
    hseq_ref[...] = h_new[None, :, :].astype(hseq_ref.dtype)

    @pl.when(t == pl.num_programs(1) - 1)
    def _():
        hfin_ref[...] = h_new.astype(hfin_ref.dtype)
        cfin_ref[...] = c_new.astype(cfin_ref.dtype)


# ----------------------------------------------------------------------------
# Wrappers
# ----------------------------------------------------------------------------
def lstm_cell_pallas(x, h, c, params):
    """x:(B,A), h/c:(B,H) -> (h_new, c_new), each (B,H)."""
    B, A = x.shape
    H = h.shape[1]
    assert A == params["A"] and H == params["H"]
    A_pad, H_pad = params["A_pad"], params["H_pad"]
    G = 4 * H_pad
    cdt = params["compute_dtype"]
    gate_dtype = _gate_dtype_for_device(cdt)

    bm = _pick_bm(B)
    B_pad = _round_up(B, bm)
    grid = (B_pad // bm,)

    xp = _pad_to(x, (B_pad, A_pad))
    hp = _pad_to(h, (B_pad, H_pad))
    cp = _pad_to(c, (B_pad, H_pad))
    w_x, w_h, bias = params["w_x"], params["w_h"], params["bias"]

    wbytes = (w_x.size + w_h.size) * w_x.dtype.itemsize
    act_bytes = (bm * A_pad + 4 * bm * H_pad) * 4
    gate_bytes = 2 * bm * G * 4
    cost = pl.CostEstimate(
        flops=2 * B_pad * (A_pad + H_pad) * G,
        transcendentals=5 * B_pad * H_pad,
        bytes_accessed=(xp.size + hp.size + cp.size + 2 * B_pad * H_pad) * 4
                        + wbytes + bias.size * 4)

    kernel = functools.partial(_lstm_cell_kernel,
                               matmul_dtype=cdt, gate_dtype=gate_dtype)

    h_new, c_new = pl.pallas_call(
        kernel,
        out_shape=(jax.ShapeDtypeStruct((B_pad, H_pad), h.dtype),
                   jax.ShapeDtypeStruct((B_pad, H_pad), c.dtype)),
        grid=grid,
        in_specs=[
            pl.BlockSpec((bm, A_pad), lambda i: (i, 0)),   # x
            pl.BlockSpec((bm, H_pad), lambda i: (i, 0)),   # h
            pl.BlockSpec((bm, H_pad), lambda i: (i, 0)),   # c
            pl.BlockSpec((A_pad, G), lambda i: (0, 0)),    # W_ih^T (padded, reordered)
            pl.BlockSpec((H_pad, G), lambda i: (0, 0)),    # W_hh^T (padded, reordered)
            pl.BlockSpec((1, G), lambda i: (0, 0)),        # pre-summed bias
        ],
        out_specs=(pl.BlockSpec((bm, H_pad), lambda i: (i, 0)),
                   pl.BlockSpec((bm, H_pad), lambda i: (i, 0))),
        input_output_aliases={1: 0, 2: 1},   # in-place state update if donated
        compiler_params=pltpu.CompilerParams(
            dimension_semantics=("parallel",),
            vmem_limit_bytes=_vmem_limit_bytes(2 * wbytes + 2 * act_bytes
                                               + gate_bytes)),
        cost_estimate=cost,
    )(xp, hp, cp, w_x, w_h, bias)

    if B_pad != B or H_pad != H:
        h_new = h_new[:B, :H]
        c_new = c_new[:B, :H]
    return h_new, c_new


def lstm_rollout_pallas(actions, h0, c0, params):
    """actions:(T,B,A), h0/c0:(B,H) -> (h_seq:(T,B,H), h_T:(B,H), c_T:(B,H)).
    One pallas_call for the whole rollout: weight DMA amortized T-fold."""
    T, B, A = actions.shape
    H = h0.shape[1]
    assert A == params["A"] and H == params["H"]
    A_pad, H_pad = params["A_pad"], params["H_pad"]
    G = 4 * H_pad
    cdt = params["compute_dtype"]
    gate_dtype = _gate_dtype_for_device(cdt)

    bm = _pick_bm(B)
    B_pad = _round_up(B, bm)
    nb = B_pad // bm

    xp = _pad_to(actions, (T, B_pad, A_pad))
    hp = _pad_to(h0, (B_pad, H_pad))
    cp = _pad_to(c0, (B_pad, H_pad))
    w_x, w_h, bias = params["w_x"], params["w_h"], params["bias"]

    wbytes = (w_x.size + w_h.size) * w_x.dtype.itemsize
    tile_bytes = (bm * A_pad + 7 * bm * H_pad) * 4 + 2 * bm * G * 4
    cost = pl.CostEstimate(
        flops=2 * T * B_pad * (A_pad + H_pad) * G,
        transcendentals=5 * T * B_pad * H_pad,
        bytes_accessed=xp.size * 4 + (T + 4) * B_pad * H_pad * 4
                        + wbytes + bias.size * 4)

    kernel = functools.partial(_lstm_rollout_kernel,
                               matmul_dtype=cdt, gate_dtype=gate_dtype)

    hseq, hfin, cfin = pl.pallas_call(
        kernel,
        out_shape=(jax.ShapeDtypeStruct((T, B_pad, H_pad), h0.dtype),
                   jax.ShapeDtypeStruct((B_pad, H_pad), h0.dtype),
                   jax.ShapeDtypeStruct((B_pad, H_pad), c0.dtype)),
        grid=(nb, T),
        in_specs=[
            pl.BlockSpec((1, bm, A_pad), lambda i, t: (t, i, 0)),  # x_t
            pl.BlockSpec((bm, H_pad), lambda i, t: (i, 0)),        # h0
            pl.BlockSpec((bm, H_pad), lambda i, t: (i, 0)),        # c0
            pl.BlockSpec((A_pad, G), lambda i, t: (0, 0)),         # W_ih^T (resident)
            pl.BlockSpec((H_pad, G), lambda i, t: (0, 0)),         # W_hh^T (resident)
            pl.BlockSpec((1, G), lambda i, t: (0, 0)),             # bias
        ],
        out_specs=(
            pl.BlockSpec((1, bm, H_pad), lambda i, t: (t, i, 0)),  # h per step
            pl.BlockSpec((bm, H_pad), lambda i, t: (i, 0)),        # final h
            pl.BlockSpec((bm, H_pad), lambda i, t: (i, 0)),        # final c
        ),
        scratch_shapes=[pltpu.VMEM((bm, H_pad), jnp.float32),
                        pltpu.VMEM((bm, H_pad), jnp.float32)],
        compiler_params=pltpu.CompilerParams(
            dimension_semantics=("parallel", "arbitrary"),
            vmem_limit_bytes=_vmem_limit_bytes(2 * wbytes + 2 * tile_bytes)),
        cost_estimate=cost,
    )(xp, hp, cp, w_x, w_h, bias)

    return hseq[:, :B, :H], hfin[:B, :H], cfin[:B, :H]


def policy_step_forward(prev_action, prev_state, params):
    """Mirror of Policy_step.forward: returns (output, (output, new_state))."""
    h, c = prev_state
    h_new, c_new = lstm_cell_pallas(prev_action, h, c, params)
    output, new_state = h_new, c_new         # torch LSTMCell returns (h1, c1)
    return output, (output, new_state)


# ----------------------------------------------------------------------------
# One-time parameter packing (hoisted OUT of the per-step path)
# ----------------------------------------------------------------------------
def preprocess_params(w_ih, w_hh, b_ih, b_hh, compute_dtype=jnp.bfloat16):
    """Pack torch-format LSTMCell params once:
      - reorder gate blocks from torch's [i|f|g|o] to [i|f|o|g]
      - zero-pad A, H (and each gate block) to 128-lane multiples
      - transpose to (in_pad, 4*H_pad); weights cast to `compute_dtype`
      - pre-sum biases (b_ih + b_hh), kept in f32 (tiny, exact add to f32 gates)
    """
    H4, A = w_ih.shape
    H = H4 // 4
    A_pad = _round_up(A, 128)
    H_pad = _round_up(H, 128)
    G = 4 * H_pad

    def pack_weight(w, in_dim, in_pad):
        i, f, g, o = jnp.split(w, 4, axis=0)               # each (H, in_dim)
        blocks = [jnp.pad(blk, ((0, H_pad - H), (0, in_pad - in_dim)))
                  for blk in (i, f, o, g)]                  # -> [i|f|o|g]
        w_r = jnp.concatenate(blocks, axis=0)               # (4*H_pad, in_pad)
        return jnp.transpose(w_r).astype(compute_dtype)     # (in_pad, 4*H_pad)

    def pack_bias(b):
        i, f, g, o = jnp.split(b, 4)
        blocks = [jnp.pad(v, (0, H_pad - H)) for v in (i, f, o, g)]
        return jnp.concatenate(blocks).reshape(1, G).astype(jnp.float32)

    return {
        "w_x": pack_weight(w_ih, A, A_pad),
        "w_h": pack_weight(w_hh, H, H_pad),
        "bias": pack_bias(b_ih + b_hh),
        "A": A, "H": H, "A_pad": A_pad, "H_pad": H_pad,
        "compute_dtype": jnp.dtype(compute_dtype),
    }


def init_raw_params(key, action_embed_size, state_embed_size, dtype=jnp.float32):
    """torch.nn.LSTMCell-style init: U(-k, k), k = 1/sqrt(hidden_size)."""
    H, A = state_embed_size, action_embed_size
    k = 1.0 / jnp.sqrt(jnp.asarray(H, dtype))
    k_ih, k_hh, k_bi, k_bh = jax.random.split(key, 4)
    return {
        "w_ih": jax.random.uniform(k_ih, (4 * H, A), dtype, -k, k),
        "w_hh": jax.random.uniform(k_hh, (4 * H, H), dtype, -k, k),
        "b_ih": jax.random.uniform(k_bi, (4 * H,), dtype, -k, k),
        "b_hh": jax.random.uniform(k_bh, (4 * H,), dtype, -k, k),
    }


def _reference_lstm_cell(x, h, c, w_ih, w_hh, b_ih, b_hh):
    """Pure-JAX reference (same math as torch.nn.LSTMCell, torch gate order)."""
    gates = x @ w_ih.T + b_ih + h @ w_hh.T + b_hh
    H = h.shape[1]
    i = jax.nn.sigmoid(gates[:, 0 * H:1 * H])
    f = jax.nn.sigmoid(gates[:, 1 * H:2 * H])
    g = jnp.tanh(gates[:, 2 * H:3 * H])
    o = jax.nn.sigmoid(gates[:, 3 * H:4 * H])
    c_new = f * c + i * g
    h_new = o * jnp.tanh(c_new)
    return h_new, c_new


if __name__ == "__main__":
    batch = 8
    action_embed_size = 32   # LSTMCell input_size
    state_embed_size = 32    # LSTMCell hidden_size
    seq_len = 6

    root = jax.random.PRNGKey(0)
    k_param, k_x, k_h, k_c, k_seq = jax.random.split(root, 5)

    raw = init_raw_params(k_param, action_embed_size, state_embed_size)
    packed_f32 = preprocess_params(raw["w_ih"], raw["w_hh"], raw["b_ih"],
                                   raw["b_hh"], compute_dtype=jnp.float32)
    packed_bf16 = preprocess_params(raw["w_ih"], raw["w_hh"], raw["b_ih"],
                                    raw["b_hh"], compute_dtype=jnp.bfloat16)
    jax.block_until_ready((packed_f32["w_x"], packed_f32["w_h"],
                           packed_f32["bias"], packed_bf16["w_x"],
                           packed_bf16["w_h"], packed_bf16["bias"]))

    prev_action = jax.random.normal(k_x, (batch, action_embed_size), jnp.float32)
    h0 = jax.random.normal(k_h, (batch, state_embed_size), jnp.float32)
    c0 = jax.random.normal(k_c, (batch, state_embed_size), jnp.float32)

    h_ref, c_ref = _reference_lstm_cell(
        prev_action, h0, c0, raw["w_ih"], raw["w_hh"], raw["b_ih"], raw["b_hh"])

    # --- single step, f32 weights: tight numerical check -------------------
    out32, (out32_again, c32) = policy_step_forward(prev_action, (h0, c0),
                                                    packed_f32)
    jax.block_until_ready((out32, c32))
    assert jnp.allclose(out32, h_ref, atol=1e-4, rtol=1e-4)
    assert jnp.allclose(c32, c_ref, atol=1e-4, rtol=1e-4)
    assert jnp.array_equal(out32, out32_again)

    # --- single step, bf16 weights (default fast path): loose check --------
    outbf, (_, cbf) = policy_step_forward(prev_action, (h0, c0), packed_bf16)
    jax.block_until_ready((outbf, cbf))
    assert jnp.allclose(outbf, h_ref, atol=1e-1, rtol=1e-1)
    assert jnp.allclose(cbf, c_ref, atol=1e-1, rtol=1e-1)

    # --- fused T-step rollout: must match iterating the step kernel --------
    actions = jax.random.normal(k_seq, (seq_len, batch, action_embed_size),
                                jnp.float32)
    h_seq, h_fin, c_fin = lstm_rollout_pallas(actions, h0, c0, packed_bf16)
    jax.block_until_ready((h_seq, h_fin, c_fin))

    h_it, c_it = h0, c0
    hs = []
    for t in range(seq_len):
        out_t, (h_it, c_it) = policy_step_forward(actions[t], (h_it, c_it),
                                                  packed_bf16)
        hs.append(out_t)
    hs = jnp.stack(hs, axis=0)
    jax.block_until_ready((hs, h_it, c_it))
    assert jnp.allclose(h_seq, hs, atol=1e-5, rtol=1e-5)
    assert jnp.allclose(h_fin, h_it, atol=1e-5, rtol=1e-5)
    assert jnp.allclose(c_fin, c_it, atol=1e-5, rtol=1e-5)

    print("KERNEL_OK")
</pallas_src>

<mosaic_0001>
module attributes {stable_mosaic.version = 11 : i64} {
  func.func @_lstm_cell_kernel(%arg0: i32, %arg1: memref<8x128xf32, #tpu.memory_space<vmem>>, %arg2: memref<8x128xf32, #tpu.memory_space<vmem>>, %arg3: memref<8x128xf32, #tpu.memory_space<vmem>>, %arg4: memref<128x512xf32, #tpu.memory_space<vmem>>, %arg5: memref<128x512xf32, #tpu.memory_space<vmem>>, %arg6: memref<1x512xf32, #tpu.memory_space<vmem>>, %arg7: memref<8x128xf32, #tpu.memory_space<vmem>>, %arg8: memref<8x128xf32, #tpu.memory_space<vmem>>) attributes {dimension_semantics = [#tpu.dimension_semantics<parallel>], iteration_bounds = array<i64: 1>, scalar_prefetch = 0 : i64, scratch_operands = 0 : i64, tpu.core_type = #tpu.core_type<tc>, window_params = [{transform_indices = @transform_0, window_bounds = array<i64: 8, 128>}, {transform_indices = @transform_1, window_bounds = array<i64: 8, 128>}, {transform_indices = @transform_2, window_bounds = array<i64: 8, 128>}, {pipeline_mode = #tpu.pipeline_mode<synchronous>, transform_indices = @transform_3, window_bounds = array<i64: 128, 512>}, {pipeline_mode = #tpu.pipeline_mode<synchronous>, transform_indices = @transform_4, window_bounds = array<i64: 128, 512>}, {pipeline_mode = #tpu.pipeline_mode<synchronous>, transform_indices = @transform_5, window_bounds = array<i64: 1, 512>}, {transform_indices = @transform_6, window_bounds = array<i64: 8, 128>}, {transform_indices = @transform_7, window_bounds = array<i64: 8, 128>}]} {
    %c0 = arith.constant 0 : index
    %c0_0 = arith.constant 0 : index
    %0 = vector.load %arg1[%c0, %c0_0] : memref<8x128xf32, #tpu.memory_space<vmem>>, vector<8x128xf32>
    %c0_1 = arith.constant 0 : index
    %c0_2 = arith.constant 0 : index
    %1 = vector.load %arg2[%c0_1, %c0_2] : memref<8x128xf32, #tpu.memory_space<vmem>>, vector<8x128xf32>
    %c0_3 = arith.constant 0 : index
    %c0_4 = arith.constant 0 : index
    %2 = vector.load %arg4[%c0_3, %c0_4] : memref<128x512xf32, #tpu.memory_space<vmem>>, vector<128x512xf32>
    %cst = arith.constant dense<0.000000e+00> : vector<8x512xf32>
    %3 = tpu.matmul %0, %2, %cst {dimension_numbers = #tpu.dot_dimension_numbers<[1], [0], [0], [1], [0, 0, 1, 1], [], []>} : vector<8x128xf32>, vector<128x512xf32>, vector<8x512xf32> -> vector<8x512xf32>
    %c0_5 = arith.constant 0 : index
    %c0_6 = arith.constant 0 : index
    %4 = vector.load %arg5[%c0_5, %c0_6] : memref<128x512xf32, #tpu.memory_space<vmem>>, vector<128x512xf32>
    %cst_7 = arith.constant dense<0.000000e+00> : vector<8x512xf32>
    %5 = tpu.matmul %1, %4, %cst_7 {dimension_numbers = #tpu.dot_dimension_numbers<[1], [0], [0], [1], [0, 0, 1, 1], [], []>} : vector<8x128xf32>, vector<128x512xf32>, vector<8x512xf32> -> vector<8x512xf32>
    %6 = arith.addf %3, %5 : vector<8x512xf32>
    %c0_8 = arith.constant 0 : index
    %c0_9 = arith.constant 0 : index
    %7 = vector.load %arg6[%c0_8, %c0_9] : memref<1x512xf32, #tpu.memory_space<vmem>>, vector<1x512xf32>
    %8 = vector.broadcast %7 : vector<1x512xf32> to vector<8x512xf32>
    %9 = arith.addf %6, %8 : vector<8x512xf32>
    %10 = vector.extract_strided_slice %9 {offsets = [0, 0], sizes = [8, 384], strides = [1, 1]} : vector<8x512xf32> to vector<8x384xf32>
    %11 = arith.negf %10 : vector<8x384xf32>
    %12 = math.exp %11 : vector<8x384xf32>
    %cst_10 = arith.constant 1.000000e+00 : f32
    %13 = vector.broadcast %cst_10 : f32 to vector<8x384xf32>
    %14 = arith.addf %13, %12 : vector<8x384xf32>
    %15 = arith.divf %13, %14 : vector<8x384xf32>
    %16 = vector.extract_strided_slice %9 {offsets = [0, 384], sizes = [8, 128], strides = [1, 1]} : vector<8x512xf32> to vector<8x128xf32>
    %17 = math.tanh %16 : vector<8x128xf32>
    %18 = vector.extract_strided_slice %15 {offsets = [0, 0], sizes = [8, 128], strides = [1, 1]} : vector<8x384xf32> to vector<8x128xf32>
    %19 = vector.extract_strided_slice %15 {offsets = [0, 128], sizes = [8, 128], strides = [1, 1]} : vector<8x384xf32> to vector<8x128xf32>
    %20 = vector.extract_strided_slice %15 {offsets = [0, 256], sizes = [8, 128], strides = [1, 1]} : vector<8x384xf32> to vector<8x128xf32>
    %c0_11 = arith.constant 0 : index
    %c0_12 = arith.constant 0 : index
    %21 = vector.load %arg3[%c0_11, %c0_12] : memref<8x128xf32, #tpu.memory_space<vmem>>, vector<8x128xf32>
    %22 = arith.mulf %19, %21 : vector<8x128xf32>
    %23 = arith.mulf %18, %17 : vector<8x128xf32>
    %24 = arith.addf %22, %23 : vector<8x128xf32>
    %25 = math.tanh %24 : vector<8x128xf32>
    %26 = arith.mulf %20, %25 : vector<8x128xf32>
    %c0_13 = arith.constant 0 : index
    %c0_14 = arith.constant 0 : index
    %27 = vector.load %arg7[%c0_13, %c0_14] : memref<8x128xf32, #tpu.memory_space<vmem>>, vector<8x128xf32>
    tpu.vector_store %arg7[%c0_13, %c0_14], %26 {strides = array<i32>} : memref<8x128xf32, #tpu.memory_space<vmem>>, vector<8x128xf32>,
    %c0_15 = arith.constant 0 : index
    %c0_16 = arith.constant 0 : index
    %28 = vector.load %arg8[%c0_15, %c0_16] : memref<8x128xf32, #tpu.memory_space<vmem>>, vector<8x128xf32>
    tpu.vector_store %arg8[%c0_15, %c0_16], %24 {strides = array<i32>} : memref<8x128xf32, #tpu.memory_space<vmem>>, vector<8x128xf32>,
    return
  }
  func.func @transform_0(%arg0: i32) -> (i32, i32) {
    %c0_i32 = arith.constant 0 : i32
    %c0_i32_0 = arith.constant 0 : i32
    return %arg0, %c0_i32 : i32, i32
  }
  func.func @transform_1(%arg0: i32) -> (i32, i32) {
    %c0_i32 = arith.constant 0 : i32
    %c0_i32_0 = arith.constant 0 : i32
    return %arg0, %c0_i32 : i32, i32
  }
  func.func @transform_2(%arg0: i32) -> (i32, i32) {
    %c0_i32 = arith.constant 0 : i32
    %c0_i32_0 = arith.constant 0 : i32
    return %arg0, %c0_i32 : i32, i32
  }
  func.func @transform_3(%arg0: i32) -> (i32, i32) {
    %c0_i32 = arith.constant 0 : i32
    %c0_i32_0 = arith.constant 0 : i32
    %c0_i32_1 = arith.constant 0 : i32
    return %c0_i32, %c0_i32_0 : i32, i32
  }
  func.func @transform_4(%arg0: i32) -> (i32, i32) {
    %c0_i32 = arith.constant 0 : i32
    %c0_i32_0 = arith.constant 0 : i32
    %c0_i32_1 = arith.constant 0 : i32
    return %c0_i32, %c0_i32_0 : i32, i32
  }
  func.func @transform_5(%arg0: i32) -> (i32, i32) {
    %c0_i32 = arith.constant 0 : i32
    %c0_i32_0 = arith.constant 0 : i32
    %c0_i32_1 = arith.constant 0 : i32
    return %c0_i32, %c0_i32_0 : i32, i32
  }
  func.func @transform_6(%arg0: i32) -> (i32, i32) {
    %c0_i32 = arith.constant 0 : i32
    %c0_i32_0 = arith.constant 0 : i32
    return %arg0, %c0_i32 : i32, i32
  }
  func.func @transform_7(%arg0: i32) -> (i32, i32) {
    %c0_i32 = arith.constant 0 : i32
    %c0_i32_0 = arith.constant 0 : i32
    return %arg0, %c0_i32 : i32, i32
  }
}

</mosaic_0001>

<llo_original>
// kernel: tpu_custom_call.1
$region0: #{tpu_custom_call.1}
  #allocation0 [shape = 'u32[]', space=smem, size = 0x4, offset = 0x4, fixed_abs, tag = 'smem constant byte address 0x4 - core index']
  #allocation1 [shape = 'u32[72,128]{1,0:T(1,128)}', space=vmem, size = 0x9000, scoped, tag = 'internal scratch']
  %s0 = inlined_call_operand.vmem [shape: f32[8,128], index: 0, kind: input, shape index: {}]
  %s1 = inlined_call_operand.hbm [shape: f32[8,128], index: 1, kind: input, shape index: {}, may-alias: {1,6}]
  %s2 = inlined_call_operand.hbm [shape: f32[8,128], index: 2, kind: input, shape index: {}, may-alias: {2,7}]
  %s3 = inlined_call_operand.hbm [shape: f32[128,512], index: 3, kind: input, shape index: {}]
  %s4 = inlined_call_operand.hbm [shape: f32[128,512], index: 4, kind: input, shape index: {}]
  %s5 = inlined_call_operand.vmem [shape: f32[1,512], index: 5, kind: input, shape index: {}]
  %s6 = inlined_call_operand.hbm [shape: f32[8,128], index: 6, kind: output, shape index: {0}, may-alias: {1,6}]
  %s7 = inlined_call_operand.hbm [shape: f32[8,128], index: 7, kind: output, shape index: {1}, may-alias: {2,7}]
  %8 = xla_tuple %s6, %s7
  %s9 = sld [smem:[#allocation0]]
  $region58: #{tpu_custom_call.1} parent=0
    _
  %s11 = ssub.s32 1, %s9
  %s12 = scalar_select 0, %s11, %s9
  $region1: #{tpu_custom_call.1} parent=0
    #allocation2 [shape = 'u8[4096]{0}', space=vmem, size = 0x1000, scoped, tag = 'input window, operand 1, single buffered']
    #allocation3 [shape = 's32[1]{0}', space=sflag, size = 0x4, scoped, tag = 'scoped memory for tpu_custom_call.1']
    #allocation4 [shape = 's32[1]{0}', space=sflag, size = 0x4, scoped, tag = 'scoped memory for tpu_custom_call.1']
    #allocation5 [shape = 'u8[4096]{0}', space=vmem, size = 0x1000, scoped, tag = 'input window, operand 2, single buffered']
    #allocation6 [shape = 's32[1]{0}', space=sflag, size = 0x4, scoped, tag = 'scoped memory for tpu_custom_call.1']
    #allocation7 [shape = 'u8[262144]{0}', space=vmem, size = 0x40000, scoped, tag = 'input window, operand 3, single buffered']
    #allocation8 [shape = 'u8[262144]{0}', space=vmem, size = 0x40000, scoped, tag = 'input window, operand 4, single buffered']
    #allocation9 [shape = 's32[1]{0}', space=sflag, size = 0x4, scoped, tag = 'scoped memory for tpu_custom_call.1']
    #allocation10 [shape = 'u8[4096]{0}', space=vmem, size = 0x1000, scoped, tag = 'output window, operand 0, single buffered']
    #allocation11 [shape = 'u8[4096]{0}', space=vmem, size = 0x1000, scoped, tag = 'output window, operand 1, single buffered']
    #allocation12 [shape = 's32[1]{0}', space=sflag, size = 0x4, scoped, tag = 'scoped memory for tpu_custom_call.1']
    %13 = vsyncpa [#allocation3], 0
    %14 = vsyncpa [#allocation6], 0
    %15 = vsyncpa [#allocation9], 0
    %16 = vsyncpa [#allocation4], 0
    %17 = vsyncpa [#allocation12], 0
    // Predicated region
    $region2: #{tpu_custom_call.1} parent=1 // pred_check
      _
    $region3: #{tpu_custom_call.1} parent=1 // pred_check_branch
      %19 = sbr.rel (0) target = $region5
    $region4: #{tpu_custom_call.1} parent=1 // pred_region
      _
    $region5: #{tpu_custom_call.1} parent=1 // pred_fallthru
      _
    // Predicated region
    $region6: #{tpu_custom_call.1} parent=1 // pred_check
      _
    $region7: #{tpu_custom_call.1} parent=1 // pred_check_branch
      %21 = sbr.rel (0) target = $region9
    $region8: #{tpu_custom_call.1} parent=1 // pred_region
      %23 = vsyncadd [#allocation3], 0
      %s25 = sshll.u32 %s1, 4
      %s26 = int_to_ptr.hbm [resolvable:$true] %s25
      %s27 = sshll.u32 [#allocation2], 4
      %s28 = int_to_ptr.vmem [resolvable:$true] %s27
      %30 = dma.hbm_to_vmem [thread:$0]  %s26, 128, %s28, [#allocation3]
    $region9: #{tpu_custom_call.1} parent=1 // pred_fallthru
      _
    // Predicated region
    $region10: #{tpu_custom_call.1} parent=1 // pred_check
      _
    $region11: #{tpu_custom_call.1} parent=1 // pred_check_branch
      %32 = sbr.rel (0) target = $region13
    $region12: #{tpu_custom_call.1} parent=1 // pred_region
      %34 = vsyncadd [#allocation6], 0
      %s36 = sshll.u32 %s2, 4
      %s37 = int_to_ptr.hbm [resolvable:$true] %s36
      %s38 = sshll.u32 [#allocation5], 4
      %s39 = int_to_ptr.vmem [resolvable:$true] %s38
      %41 = dma.hbm_to_vmem [thread:$0]  %s37, 128, %s39, [#allocation6]
    $region13: #{tpu_custom_call.1} parent=1 // pred_fallthru
      _
    // Predicated region
    $region14: #{tpu_custom_call.1} parent=1 // pred_check
      _
    $region15: #{tpu_custom_call.1} parent=1 // pred_check_branch
      %43 = sbr.rel (0) target = $region17
    $region16: #{tpu_custom_call.1} parent=1 // pred_region
      %45 = vsyncadd [#allocation6], 0
      %s46 = sshll.u32 %s3, 4
      %s47 = int_to_ptr.hbm [resolvable:$true] %s46
      %s48 = sshll.u32 [#allocation7], 4
      %s49 = int_to_ptr.vmem [resolvable:$true] %s48
      %54 = dma.hbm_to_vmem [thread:$0]  %s47, 8192, %s49, [#allocation6], 512, 512, 32
    $region17: #{tpu_custom_call.1} parent=1 // pred_fallthru
      _
    // Predicated region
    $region18: #{tpu_custom_call.1} parent=1 // pred_check
      _
    $region19: #{tpu_custom_call.1} parent=1 // pred_check_branch
      %56 = sbr.rel (0) target = $region21
    $region20: #{tpu_custom_call.1} parent=1 // pred_region
      %58 = vsyncadd [#allocation9], 0
      %s59 = sshll.u32 %s4, 4
      %s60 = int_to_ptr.hbm [resolvable:$true] %s59
      %s61 = sshll.u32 [#allocation8], 4
      %s62 = int_to_ptr.vmem [resolvable:$true] %s61
      %67 = dma.hbm_to_vmem [thread:$0]  %s60, 8192, %s62, [#allocation9], 512, 512, 32
    $region21: #{tpu_custom_call.1} parent=1 // pred_fallthru
      _
    // Predicated region
    $region22: #{tpu_custom_call.1} parent=1 // pred_check
      _
    $region23: #{tpu_custom_call.1} parent=1 // pred_check_branch
      %69 = sbr.rel (0) target = $region25
    $region24: #{tpu_custom_call.1} parent=1 // pred_region
      _
    $region25: #{tpu_custom_call.1} parent=1 // pred_fallthru
      _
    // Predicated region
    $region26: #{tpu_custom_call.1} parent=1 // pred_check
      _
    $region27: #{tpu_custom_call.1} parent=1 // pred_check_branch
      %71 = sbr.rel (0) target = $region29
    $region28: #{tpu_custom_call.1} parent=1 // pred_region
      %73 = dma.done [#allocation3], 128
    $region29: #{tpu_custom_call.1} parent=1 // pred_fallthru
      _
    // Predicated region
    $region30: #{tpu_custom_call.1} parent=1 // pred_check
      _
    $region31: #{tpu_custom_call.1} parent=1 // pred_check_branch
      %75 = sbr.rel (0) target = $region33
    $region32: #{tpu_custom_call.1} parent=1 // pred_region
      %77 = dma.done [#allocation6], 128
    $region33: #{tpu_custom_call.1} parent=1 // pred_fallthru
      _
    // Predicated region
    $region34: #{tpu_custom_call.1} parent=1 // pred_check
      _
    $region35: #{tpu_custom_call.1} parent=1 // pred_check_branch
      %79 = sbr.rel (0) target = $region37
    $region36: #{tpu_custom_call.1} parent=1 // pred_region
      %81 = dma.done [#allocation6], 8192
    $region37: #{tpu_custom_call.1} parent=1 // pred_fallthru
      _
    // Predicated region
    $region38: #{tpu_custom_call.1} parent=1 // pred_check
      _
    $region39: #{tpu_custom_call.1} parent=1 // pred_check_branch
      %83 = sbr.rel (0) target = $region41
    $region40: #{tpu_custom_call.1} parent=1 // pred_region
      %85 = dma.done [#allocation9], 8192
    $region41: #{tpu_custom_call.1} parent=1 // pred_fallthru
      _
    %v86 = vld [vmem:[%s0] sm:$0xff]
    %v87 = vld [vmem:[#allocation2] sm:$0xff]
    %v88 = vld [vmem:[#allocation7] sm:$0xff]
    %v89 = vld [vmem:[#allocation7 + $0x8] sm:$0xff]
    %v90 = vld [vmem:[#allocation7 + $0x10] sm:$0xff]
    %v91 = vld [vmem:[#allocation7 + $0x18] sm:$0xff]
    %v92 = vld [vmem:[#allocation7 + $0x20] sm:$0xff]
    %v93 = vld [vmem:[#allocation7 + $0x28] sm:$0xff]
    %v94 = vld [vmem:[#allocation7 + $0x30] sm:$0xff]
    %v95 = vld [vmem:[#allocation7 + $0x38] sm:$0xff]
    %v96 = vld [vmem:[#allocation7 + $0x40] sm:$0xff]
    %v97 = vld [vmem:[#allocation7 + $0x48] sm:$0xff]
    %v98 = vld [vmem:[#allocation7 + $0x50] sm:$0xff]
    %v99 = vld [vmem:[#allocation7 + $0x58] sm:$0xff]
    %v100 = vld [vmem:[#allocation7 + $0x60] sm:$0xff]
    %v101 = vld [vmem:[#allocation7 + $0x68] sm:$0xff]
    %v102 = vld [vmem:[#allocation7 + $0x70] sm:$0xff]
    %v103 = vld [vmem:[#allocation7 + $0x78] sm:$0xff]
    %v104 = vld [vmem:[#allocation7 + $0x80] sm:$0xff]
    %v105 = vld [vmem:[#allocation7 + $0x88] sm:$0xff]
    %v106 = vld [vmem:[#allocation7 + $0x90] sm:$0xff]
    %v107 = vld [vmem:[#allocation7 + $0x98] sm:$0xff]
    %v108 = vld [vmem:[#allocation7 + $0xa0] sm:$0xff]
    %v109 = vld [vmem:[#allocation7 + $0xa8] sm:$0xff]
    %v110 = vld [vmem:[#allocation7 + $0xb0] sm:$0xff]
    %v111 = vld [vmem:[#allocation7 + $0xb8] sm:$0xff]
    %v112 = vld [vmem:[#allocation7 + $0xc0] sm:$0xff]
    %v113 = vld [vmem:[#allocation7 + $0xc8] sm:$0xff]
    %v114 = vld [vmem:[#allocation7 + $0xd0] sm:$0xff]
    %v115 = vld [vmem:[#allocation7 + $0xd8] sm:$0xff]
    %v116 = vld [vmem:[#allocation7 + $0xe0] sm:$0xff]
    %v117 = vld [vmem:[#allocation7 + $0xe8] sm:$0xff]
    %v118 = vld [vmem:[#allocation7 + $0xf0] sm:$0xff]
    %v119 = vld [vmem:[#allocation7 + $0xf8] sm:$0xff]
    %v120 = vld [vmem:[#allocation7 + $0x100] sm:$0xff]
    %v121 = vld [vmem:[#allocation7 + $0x108] sm:$0xff]
    %v122 = vld [vmem:[#allocation7 + $0x110] sm:$0xff]
    %v123 = vld [vmem:[#allocation7 + $0x118] sm:$0xff]
    %v124 = vld [vmem:[#allocation7 + $0x120] sm:$0xff]
    %v125 = vld [vmem:[#allocation7 + $0x128] sm:$0xff]
    %v126 = vld [vmem:[#allocation7 + $0x130] sm:$0xff]
    %v127 = vld [vmem:[#allocation7 + $0x138] sm:$0xff]
    %v128 = vld [vmem:[#allocation7 + $0x140] sm:$0xff]
    %v129 = vld [vmem:[#allocation7 + $0x148] sm:$0xff]
    %v130 = vld [vmem:[#allocation7 + $0x150] sm:$0xff]
    %v131 = vld [vmem:[#allocation7 + $0x158] sm:$0xff]
    %v132 = vld [vmem:[#allocation7 + $0x160] sm:$0xff]
    %v133 = vld [vmem:[#allocation7 + $0x168] sm:$0xff]
    %v134 = vld [vmem:[#allocation7 + $0x170] sm:$0xff]
    %v135 = vld [vmem:[#allocation7 + $0x178] sm:$0xff]
    %v136 = vld [vmem:[#allocation7 + $0x180] sm:$0xff]
    %v137 = vld [vmem:[#allocation7 + $0x188] sm:$0xff]
    %v138 = vld [vmem:[#allocation7 + $0x190] sm:$0xff]
    %v139 = vld [vmem:[#allocation7 + $0x198] sm:$0xff]
    %v140 = vld [vmem:[#allocation7 + $0x1a0] sm:$0xff]
    %v141 = vld [vmem:[#allocation7 + $0x1a8] sm:$0xff]
    %v142 = vld [vmem:[#allocation7 + $0x1b0] sm:$0xff]
    %v143 = vld [vmem:[#allocation7 + $0x1b8] sm:$0xff]
    %v144 = vld [vmem:[#allocation7 + $0x1c0] sm:$0xff]
    %v145 = vld [vmem:[#allocation7 + $0x1c8] sm:$0xff]
    %v146 = vld [vmem:[#allocation7 + $0x1d0] sm:$0xff]
    %v147 = vld [vmem:[#allocation7 + $0x1d8] sm:$0xff]
    %v148 = vld [vmem:[#allocation7 + $0x1e0] sm:$0xff]
    %v149 = vld [vmem:[#allocation7 + $0x1e8] sm:$0xff]
    %v150 = vld [vmem:[#allocation7 + $0x1f0] sm:$0xff]
    %v151 = vld [vmem:[#allocation7 + $0x1f8] sm:$0xff]
    %v152 = vld [vmem:[#allocation8] sm:$0xff]
    %v153 = vld [vmem:[#allocation8 + $0x8] sm:$0xff]
    %v154 = vld [vmem:[#allocation8 + $0x10] sm:$0xff]
    %v155 = vld [vmem:[#allocation8 + $0x18] sm:$0xff]
    %v156 = vld [vmem:[#allocation8 + $0x20] sm:$0xff]
    %v157 = vld [vmem:[#allocation8 + $0x28] sm:$0xff]
    %v158 = vld [vmem:[#allocation8 + $0x30] sm:$0xff]
    %v159 = vld [vmem:[#allocation8 + $0x38] sm:$0xff]
    %v160 = vld [vmem:[#allocation8 + $0x40] sm:$0xff]
    %v161 = vld [vmem:[#allocation8 + $0x48] sm:$0xff]
    %v162 = vld [vmem:[#allocation8 + $0x50] sm:$0xff]
    %v163 = vld [vmem:[#allocation8 + $0x58] sm:$0xff]
    %v164 = vld [vmem:[#allocation8 + $0x60] sm:$0xff]
    %v165 = vld [vmem:[#allocation8 + $0x68] sm:$0xff]
    %v166 = vld [vmem:[#allocation8 + $0x70] sm:$0xff]
    %v167 = vld [vmem:[#allocation8 + $0x78] sm:$0xff]
    %v168 = vld [vmem:[#allocation8 + $0x80] sm:$0xff]
    %v169 = vld [vmem:[#allocation8 + $0x88] sm:$0xff]
    %v170 = vld [vmem:[#allocation8 + $0x90] sm:$0xff]
    %v171 = vld [vmem:[#allocation8 + $0x98] sm:$0xff]
    %v172 = vld [vmem:[#allocation8 + $0xa0] sm:$0xff]
    %v173 = vld [vmem:[#allocation8 + $0xa8] sm:$0xff]
    %v174 = vld [vmem:[#allocation8 + $0xb0] sm:$0xff]
    %v175 = vld [vmem:[#allocation8 + $0xb8] sm:$0xff]
    %v176 = vld [vmem:[#allocation8 + $0xc0] sm:$0xff]
    %v177 = vld [vmem:[#allocation8 + $0xc8] sm:$0xff]
    %v178 = vld [vmem:[#allocation8 + $0xd0] sm:$0xff]
    %v179 = vld [vmem:[#allocation8 + $0xd8] sm:$0xff]
    %v180 = vld [vmem:[#allocation8 + $0xe0] sm:$0xff]
    %v181 = vld [vmem:[#allocation8 + $0xe8] sm:$0xff]
    %v182 = vld [vmem:[#allocation8 + $0xf0] sm:$0xff]
    %v183 = vld [vmem:[#allocation8 + $0xf8] sm:$0xff]
    %v184 = vld [vmem:[#allocation8 + $0x100] sm:$0xff]
    %v185 = vld [vmem:[#allocation8 + $0x108] sm:$0xff]
    %v186 = vld [vmem:[#allocation8 + $0x110] sm:$0xff]
    %v187 = vld [vmem:[#allocation8 + $0x118] sm:$0xff]
    %v188 = vld [vmem:[#allocation8 + $0x120] sm:$0xff]
    %v189 = vld [vmem:[#allocation8 + $0x128] sm:$0xff]
    %v190 = vld [vmem:[#allocation8 + $0x130] sm:$0xff]
    %v191 = vld [vmem:[#allocation8 + $0x138] sm:$0xff]
    %v192 = vld [vmem:[#allocation8 + $0x140] sm:$0xff]
    %v193 = vld [vmem:[#allocation8 + $0x148] sm:$0xff]
    %v194 = vld [vmem:[#allocation8 + $0x150] sm:$0xff]
    %v195 = vld [vmem:[#allocation8 + $0x158] sm:$0xff]
    %v196 = vld [vmem:[#allocation8 + $0x160] sm:$0xff]
    %v197 = vld [vmem:[#allocation8 + $0x168] sm:$0xff]
    %v198 = vld [vmem:[#allocation8 + $0x170] sm:$0xff]
    %v199 = vld [vmem:[#allocation8 + $0x178] sm:$0xff]
    %v200 = vld [vmem:[#allocation8 + $0x180] sm:$0xff]
    %v201 = vld [vmem:[#allocation8 + $0x188] sm:$0xff]
    %v202 = vld [vmem:[#allocation8 + $0x190] sm:$0xff]
    %v203 = vld [vmem:[#allocation8 + $0x198] sm:$0xff]
    %v204 = vld [vmem:[#allocation8 + $0x1a0] sm:$0xff]
    %v205 = vld [vmem:[#allocation8 + $0x1a8] sm:$0xff]
    %v206 = vld [vmem:[#allocation8 + $0x1b0] sm:$0xff]
    %v207 = vld [vmem:[#allocation8 + $0x1b8] sm:$0xff]
    %v208 = vld [vmem:[#allocation8 + $0x1c0] sm:$0xff]
    %v209 = vld [vmem:[#allocation8 + $0x1c8] sm:$0xff]
    %v210 = vld [vmem:[#allocation8 + $0x1d0] sm:$0xff]
    %v211 = vld [vmem:[#allocation8 + $0x1d8] sm:$0xff]
    %v212 = vld [vmem:[#allocation8 + $0x1e0] sm:$0xff]
    %v213 = vld [vmem:[#allocation8 + $0x1e8] sm:$0xff]
    %v214 = vld [vmem:[#allocation8 + $0x1f0] sm:$0xff]
    %v215 = vld [vmem:[#allocation8 + $0x1f8] sm:$0xff]
    %216 = vmatpush.msra.mxu0 %v212
    %217 = vmatpush.msra.mxu0 %v208
    %218 = vmatpush.msra.mxu0 %v204
    %219 = vmatpush.msra.mxu0 %v200
    %220 = vmatpush.msra.mxu0 %v196
    %221 = vmatpush.msra.mxu0 %v192
    %222 = vmatpush.msra.mxu0 %v188
    %223 = vmatpush.msra.mxu0 %v184
    %224 = vmatpush.msra.mxu0 %v180
    %225 = vmatpush.msra.mxu0 %v176
    %226 = vmatpush.msra.mxu0 %v172
    %227 = vmatpush.msra.mxu0 %v168
    %228 = vmatpush.msra.mxu0 %v164
    %229 = vmatpush.msra.mxu0 %v160
    %230 = vmatpush.msra.mxu0 %v156
    %231 = vmatpush.msra.mxu0 %v152
    %232 = vmatmul.f32.gmra.mxu0 %v87
    %v233 = vpop.f32.mrf.mxu0
    %v234 = vadd.f32 0.0, %v233
    %235 = vdwg.mxu0
    %236 = vmatpush.msra.mxu0 %v213
    %237 = vmatpush.msra.mxu0 %v209
    %238 = vmatpush.msra.mxu0 %v205
    %239 = vmatpush.msra.mxu0 %v201
    %240 = vmatpush.msra.mxu0 %v197
    %241 = vmatpush.msra.mxu0 %v193
    %242 = vmatpush.msra.mxu0 %v189
    %243 = vmatpush.msra.mxu0 %v185
    %244 = vmatpush.msra.mxu0 %v181
    %245 = vmatpush.msra.mxu0 %v177
    %246 = vmatpush.msra.mxu0 %v173
    %247 = vmatpush.msra.mxu0 %v169
    %248 = vmatpush.msra.mxu0 %v165
    %249 = vmatpush.msra.mxu0 %v161
    %250 = vmatpush.msra.mxu0 %v157
    %251 = vmatpush.msra.mxu0 %v153
    %252 = vmatmul.f32.gmra.mxu0 %v87
    %v253 = vpop.f32.mrf.mxu0
    %v254 = vadd.f32 0.0, %v253
    %255 = vdwg.mxu0
    %256 = vmatpush.msra.mxu0 %v214
    %257 = vmatpush.msra.mxu0 %v210
    %258 = vmatpush.msra.mxu0 %v206
    %259 = vmatpush.msra.mxu0 %v202
    %260 = vmatpush.msra.mxu0 %v198
    %261 = vmatpush.msra.mxu0 %v194
    %262 = vmatpush.msra.mxu0 %v190
    %263 = vmatpush.msra.mxu0 %v186
    %264 = vmatpush.msra.mxu0 %v182
    %265 = vmatpush.msra.mxu0 %v178
    %266 = vmatpush.msra.mxu0 %v174
    %267 = vmatpush.msra.mxu0 %v170
    %268 = vmatpush.msra.mxu0 %v166
    %269 = vmatpush.msra.mxu0 %v162
    %270 = vmatpush.msra.mxu0 %v158
    %271 = vmatpush.msra.mxu0 %v154
    %272 = vmatmul.f32.gmra.mxu0 %v87
    %v273 = vpop.f32.mrf.mxu0
    %v274 = vadd.f32 0.0, %v273
    %275 = vdwg.mxu0
    %276 = vmatpush.msra.mxu0 %v215
    %277 = vmatpush.msra.mxu0 %v211
    %278 = vmatpush.msra.mxu0 %v207
    %279 = vmatpush.msra.mxu0 %v203
    %280 = vmatpush.msra.mxu0 %v199
    %281 = vmatpush.msra.mxu0 %v195
    %282 = vmatpush.msra.mxu0 %v191
    %283 = vmatpush.msra.mxu0 %v187
    %284 = vmatpush.msra.mxu0 %v183
    %285 = vmatpush.msra.mxu0 %v179
    %286 = vmatpush.msra.mxu0 %v175
    %287 = vmatpush.msra.mxu0 %v171
    %288 = vmatpush.msra.mxu0 %v167
    %289 = vmatpush.msra.mxu0 %v163
    %290 = vmatpush.msra.mxu0 %v159
    %291 = vmatpush.msra.mxu0 %v155
    %292 = vmatmul.f32.gmra.mxu0 %v87
    %v293 = vpop.f32.mrf.mxu0
    %v294 = vadd.f32 0.0, %v293
    %295 = vdwg.mxu0
    %296 = vmatpush.msra.mxu0 %v148
    %297 = vmatpush.msra.mxu0 %v144
    %298 = vmatpush.msra.mxu0 %v140
    %299 = vmatpush.msra.mxu0 %v136
    %300 = vmatpush.msra.mxu0 %v132
    %301 = vmatpush.msra.mxu0 %v128
    %302 = vmatpush.msra.mxu0 %v124
    %303 = vmatpush.msra.mxu0 %v120
    %304 = vmatpush.msra.mxu0 %v116
    %305 = vmatpush.msra.mxu0 %v112
    %306 = vmatpush.msra.mxu0 %v108
    %307 = vmatpush.msra.mxu0 %v104
    %308 = vmatpush.msra.mxu0 %v100
    %309 = vmatpush.msra.mxu0 %v96
    %310 = vmatpush.msra.mxu0 %v92
    %311 = vmatpush.msra.mxu0 %v88
    %312 = vmatmul.f32.gmra.mxu0 %v86
    %v313 = vpop.f32.mrf.mxu0
    %v314 = vadd.f32 %v234, %v313
    %315 = vdwg.mxu0
    %316 = vmatpush.msra.mxu0 %v149
    %317 = vmatpush.msra.mxu0 %v145
    %318 = vmatpush.msra.mxu0 %v141
    %319 = vmatpush.msra.mxu0 %v137
    %320 = vmatpush.msra.mxu0 %v133
    %321 = vmatpush.msra.mxu0 %v129
    %322 = vmatpush.msra.mxu0 %v125
    %323 = vmatpush.msra.mxu0 %v121
    %324 = vmatpush.msra.mxu0 %v117
    %325 = vmatpush.msra.mxu0 %v113
    %326 = vmatpush.msra.mxu0 %v109
    %327 = vmatpush.msra.mxu0 %v105
    %328 = vmatpush.msra.mxu0 %v101
    %329 = vmatpush.msra.mxu0 %v97
    %330 = vmatpush.msra.mxu0 %v93
    %331 = vmatpush.msra.mxu0 %v89
    %332 = vmatmul.f32.gmra.mxu0 %v86
    %v333 = vpop.f32.mrf.mxu0
    %v334 = vadd.f32 %v254, %v333
    %335 = vdwg.mxu0
    %336 = vmatpush.msra.mxu0 %v150
    %337 = vmatpush.msra.mxu0 %v146
    %338 = vmatpush.msra.mxu0 %v142
    %339 = vmatpush.msra.mxu0 %v138
    %340 = vmatpush.msra.mxu0 %v134
    %341 = vmatpush.msra.mxu0 %v130
    %342 = vmatpush.msra.mxu0 %v126
    %343 = vmatpush.msra.mxu0 %v122
    %344 = vmatpush.msra.mxu0 %v118
    %345 = vmatpush.msra.mxu0 %v114
    %346 = vmatpush.msra.mxu0 %v110
    %347 = vmatpush.msra.mxu0 %v106
    %348 = vmatpush.msra.mxu0 %v102
    %349 = vmatpush.msra.mxu0 %v98
    %350 = vmatpush.msra.mxu0 %v94
    %351 = vmatpush.msra.mxu0 %v90
    %352 = vmatmul.f32.gmra.mxu0 %v86
    %v353 = vpop.f32.mrf.mxu0
    %v354 = vadd.f32 %v274, %v353
    %355 = vdwg.mxu0
    %356 = vmatpush.msra.mxu0 %v151
    %357 = vmatpush.msra.mxu0 %v147
    %358 = vmatpush.msra.mxu0 %v143
    %359 = vmatpush.msra.mxu0 %v139
    %360 = vmatpush.msra.mxu0 %v135
    %361 = vmatpush.msra.mxu0 %v131
    %362 = vmatpush.msra.mxu0 %v127
    %363 = vmatpush.msra.mxu0 %v123
    %364 = vmatpush.msra.mxu0 %v119
    %365 = vmatpush.msra.mxu0 %v115
    %366 = vmatpush.msra.mxu0 %v111
    %367 = vmatpush.msra.mxu0 %v107
    %368 = vmatpush.msra.mxu0 %v103
    %369 = vmatpush.msra.mxu0 %v99
    %370 = vmatpush.msra.mxu0 %v95
    %371 = vmatpush.msra.mxu0 %v91
    %372 = vmatmul.f32.gmra.mxu0 %v86
    %v373 = vpop.f32.mrf.mxu0
    %v374 = vadd.f32 %v294, %v373
    %375 = vdwg.mxu0
    %v376 = vld [vmem:[%s5] sm:$0xf]
    %v378 = vperm.slane %v376, 0
    %v379 = vperm.slane %v376, 1
    %v380 = vperm.slane %v376, 2
    %v381 = vperm.slane %v376, 3
    %v386 = vadd.f32 %v314, %v378
    %v387 = vadd.f32 %v334, %v379
    %v388 = vadd.f32 %v354, %v380
    %v389 = vadd.f32 %v374, %v381
    %v390 = vxor.u32 %v386, 2147483648
    %v391 = vxor.u32 %v387, 2147483648
    %v392 = vxor.u32 %v388, 2147483648
    %v393 = vmul.f32 %v390, 1.442695
    %v394 = vpow.pop %v393
    %v395 = vmul.f32 %v391, 1.442695
    %v396 = vpow.pop %v395
    %v397 = vmul.f32 %v392, 1.442695
    %v398 = vpow.pop %v397
    %v399 = vadd.f32 %v394, 1.0
    %v400 = vadd.f32 %v396, 1.0
    %v401 = vadd.f32 %v398, 1.0
    %v402 = vrcp.pop %v399
    %v403 = vmul.f32 %v399, %v402
    %v404 = vsub.f32 1.0, %v403
    %v405 = vmul.f32 %v402, %v404
    %v406 = vadd.f32 %v402, %v405
    %vm407 = vweird.f32 %v399
    %vm408 = vweird.f32 %v402
    %vm409 = vmor %vm407, %vm408
    %v410 = vsel %vm409, %v402, %v406
    %v411 = vand.u32 2147483647, %v399
    %vm412 = vcmp.eq.f32.partialorder %v411, 8.507059e+37
    %v413 = vand.u32 %v399, 2147483648
    %v414 = vor.u32 1.1754944e-38, %v413
    %v415 = vsel %vm412, %v414, %v410
    %v416 = vmul.f32 1.0, %v415
    %v417 = vrcp.pop %v400
    %v418 = vmul.f32 %v400, %v417
    %v419 = vsub.f32 1.0, %v418
    %v420 = vmul.f32 %v417, %v419
    %v421 = vadd.f32 %v417, %v420
    %vm422 = vweird.f32 %v400
    %vm423 = vweird.f32 %v417
    %vm424 = vmor %vm422, %vm423
    %v425 = vsel %vm424, %v417, %v421
    %v426 = vand.u32 2147483647, %v400
    %vm427 = vcmp.eq.f32.partialorder %v426, 8.507059e+37
    %v428 = vand.u32 %v400, 2147483648
    %v429 = vor.u32 1.1754944e-38, %v428
    %v430 = vsel %vm427, %v429, %v425
    %v431 = vmul.f32 1.0, %v430
    %v432 = vrcp.pop %v401
    %v433 = vmul.f32 %v401, %v432
    %v434 = vsub.f32 1.0, %v433
    %v435 = vmul.f32 %v432, %v434
    %v436 = vadd.f32 %v432, %v435
    %vm437 = vweird.f32 %v401
    %vm438 = vweird.f32 %v432
    %vm439 = vmor %vm437, %vm438
    %v440 = vsel %vm439, %v432, %v436
    %v441 = vand.u32 2147483647, %v401
    %vm442 = vcmp.eq.f32.partialorder %v441, 8.507059e+37
    %v443 = vand.u32 %v401, 2147483648
    %v444 = vor.u32 1.1754944e-38, %v443
    %v445 = vsel %vm442, %v444, %v440
    %v446 = vmul.f32 1.0, %v445
    %v447 = vtanh.pop %v389
    %v448 = vld [vmem:[#allocation5] sm:$0xff]
    %v449 = vmul.f32 %v431, %v448
    %v450 = vmul.f32 %v416, %v447
    %v451 = vadd.f32 %v449, %v450
    %v452 = vtanh.pop %v451
    %v453 = vmul.f32 %v446, %v452
    %454 = vst [vmem:[#allocation10] sm:$0xff] %v453
    %455 = vst [vmem:[#allocation11] sm:$0xff] %v451
    // Predicated region
    $region42: #{tpu_custom_call.1} parent=1 // pred_check
      _
    $region43: #{tpu_custom_call.1} parent=1 // pred_check_branch
      %457 = sbr.rel (0) target = $region45
    $region44: #{tpu_custom_call.1} parent=1 // pred_region
      %459 = vsyncadd [#allocation4], 0
      %s461 = sshll.u32 [#allocation10], 4
      %s462 = int_to_ptr.vmem [resolvable:$true] %s461
      %s463 = sshll.u32 %s6, 4
      %s464 = int_to_ptr.hbm [resolvable:$true] %s463
      %466 = dma.vmem_to_hbm [thread:$0]  %s462, 128, %s464, [#allocation4]
    $region45: #{tpu_custom_call.1} parent=1 // pred_fallthru
      _
    // Predicated region
    $region46: #{tpu_custom_call.1} parent=1 // pred_check
      _
    $region47: #{tpu_custom_call.1} parent=1 // pred_check_branch
      %468 = sbr.rel (0) target = $region49
    $region48: #{tpu_custom_call.1} parent=1 // pred_region
      %470 = vsyncadd [#allocation12], 0
      %s472 = sshll.u32 [#allocation11], 4
      %s473 = int_to_ptr.vmem [resolvable:$true] %s472
      %s474 = sshll.u32 %s7, 4
      %s475 = int_to_ptr.hbm [resolvable:$true] %s474
      %477 = dma.vmem_to_hbm [thread:$0]  %s473, 128, %s475, [#allocation12]
    $region49: #{tpu_custom_call.1} parent=1 // pred_fallthru
      _
    // Predicated region
    $region50: #{tpu_custom_call.1} parent=1 // pred_check
      _
    $region51: #{tpu_custom_call.1} parent=1 // pred_check_branch
      %479 = sbr.rel (0) target = $region53
    $region52: #{tpu_custom_call.1} parent=1 // pred_region
      %481 = dma.done [#allocation4], 128
    $region53: #{tpu_custom_call.1} parent=1 // pred_fallthru
      _
    // Predicated region
    $region54: #{tpu_custom_call.1} parent=1 // pred_check
      _
    $region55: #{tpu_custom_call.1} parent=1 // pred_check_branch
      %483 = sbr.rel (0) target = $region57
    $region56: #{tpu_custom_call.1} parent=1 // pred_region
      %485 = dma.done [#allocation12], 128
    $region57: #{tpu_custom_call.1} parent=1 // pred_fallthru
      _
    %486 = vsyncpa [#allocation3], 1
    %487 = vsyncpa [#allocation6], 1
    %488 = vsyncpa [#allocation9], 1
    %489 = vsyncpa [#allocation4], 1
    %490 = vsyncpa [#allocation12], 1

</llo_original>
